<compile_context>
chip_gen: v7x
topology: tpu7x:2x2x1
jax: 0.10.0
libtpu: 0.0.40
codegen_flags: <defaults>
</compile_context>

<pallas_src>
import jax
import jax.numpy as jnp
from jax.experimental import pallas as pl
from jax.experimental.pallas import tpu as pltpu

_SUBLANES = 8
_LANES_MIN = 128
_LANES_WIDE = 1024
_TILE_ROWS = 256  # 256 rows x 1024 lanes x 4 B = 1 MiB per input buffer


def _weighted_loss_kernel(alpha_ref, mse_ref, lpips_ref, out_ref):
    # alpha_ref: (1, 1) scalar in SMEM; mse/lpips/out: (tile_rows, lanes) VMEM.
    a = alpha_ref[0, 0]
    out_ref[...] = (1.0 - a) * mse_ref[...] + a * lpips_ref[...]


def weighted_loss(mse_loss, lpips_loss, alpha):
    """Computes (1 - alpha) * mse_loss + alpha * lpips_loss elementwise."""
    mse = jnp.asarray(mse_loss, jnp.float32)
    lpips = jnp.asarray(lpips_loss, jnp.float32)
    assert mse.shape == lpips.shape, "losses must have the same shape"

    orig_shape = mse.shape
    n = mse.size

    # Lane-dense layout: wide lanes whenever at least one full (8, 1024) tile
    # worth of data exists; otherwise minimum-aligned 128 lanes.
    lanes = _LANES_WIDE if n >= _SUBLANES * _LANES_WIDE else _LANES_MIN
    pad_unit = _SUBLANES * lanes
    n_pad = pl.cdiv(n, pad_unit) * pad_unit

    mse_flat = mse.reshape(-1)
    lpips_flat = lpips.reshape(-1)
    if n_pad != n:  # skip the extra HBM round trip when already aligned
        mse_flat = jnp.pad(mse_flat, (0, n_pad - n))
        lpips_flat = jnp.pad(lpips_flat, (0, n_pad - n))

    rows = n_pad // lanes                 # always a multiple of 8
    tile_rows = min(rows, _TILE_ROWS)     # full array, or 256-row tiles
    grid = (pl.cdiv(rows, tile_rows),)    # ragged last block handled by Pallas

    mse2d = mse_flat.reshape(rows, lanes)
    lpips2d = lpips_flat.reshape(rows, lanes)
    alpha_smem = jnp.asarray(alpha, jnp.float32).reshape(1, 1)

    out2d = pl.pallas_call(
        _weighted_loss_kernel,
        out_shape=jax.ShapeDtypeStruct((rows, lanes), jnp.float32),
        grid_spec=pltpu.PrefetchScalarGridSpec(
            num_scalar_prefetch=0,
            grid=grid,
            in_specs=[
                pl.BlockSpec(memory_space=pltpu.MemorySpace.SMEM),    # alpha
                pl.BlockSpec((tile_rows, lanes), lambda i: (i, 0)),   # mse
                pl.BlockSpec((tile_rows, lanes), lambda i: (i, 0)),   # lpips
            ],
            out_specs=pl.BlockSpec((tile_rows, lanes), lambda i: (i, 0)),
        ),
        compiler_params=pltpu.CompilerParams(
            # "parallel" lets v7x shard row-tiles across its 2 TensorCores.
            dimension_semantics=("parallel",),
            # Headroom over v5e's 16 MiB scoped default for the double-buffered
            # 1 MiB tiles; well under v7x's 64 MiB physical VMEM.
            vmem_limit_bytes=32 * 1024 * 1024,
        ),
        cost_estimate=pl.CostEstimate(
            flops=3 * n_pad, bytes_accessed=12 * n_pad, transcendentals=0),
    )(alpha_smem, mse2d, lpips2d)

    out_flat = out2d.reshape(-1)
    if n_pad != n:
        out_flat = out_flat[:n]
    return out_flat.reshape(orig_shape)


def weighted_loss_ref(mse_loss, lpips_loss, alpha):
    return (1.0 - alpha) * mse_loss + alpha * lpips_loss


if __name__ == "__main__":
    # Deterministic parameter init, matching nn.Parameter(clamp(0.1, 0, 1)).
    alpha = jnp.clip(jnp.float32(0.1), 0.0, 1.0)

    key = jax.random.PRNGKey(0)
    k1, k2, k3, k4, k5, k6 = jax.random.split(key, 6)

    # Case 1: module-sized small input (single-block, 128-lane path).
    shape_small = (2, 4, 16, 16)
    mse_s = jax.random.uniform(k1, shape_small, dtype=jnp.float32)
    lpips_s = jax.random.uniform(k2, shape_small, dtype=jnp.float32)
    out_s = jax.block_until_ready(weighted_loss(mse_s, lpips_s, alpha))
    ref_s = weighted_loss_ref(mse_s, lpips_s, alpha)
    assert out_s.shape == shape_small
    assert jnp.allclose(out_s, ref_s, atol=1e-6, rtol=1e-6), "small mismatch"

    # Case 2: larger aligned input (wide-tile, multi-step path, no pad copy).
    shape_big = (8, 4, 128, 128)  # 524288 elems -> 512 rows -> 2 grid steps
    mse_b = jax.random.uniform(k3, shape_big, dtype=jnp.float32)
    lpips_b = jax.random.uniform(k4, shape_big, dtype=jnp.float32)
    out_b = jax.block_until_ready(weighted_loss(mse_b, lpips_b, alpha))
    ref_b = weighted_loss_ref(mse_b, lpips_b, alpha)
    assert out_b.shape == shape_big
    assert jnp.allclose(out_b, ref_b, atol=1e-6, rtol=1e-6), "big mismatch"

    # Case 3: ragged row count (264 rows -> cdiv grid, clipped boundary block,
    # still no pad copy since the size is a multiple of 8*1024).
    shape_ragged = (33, 64, 128)  # 270336 elems -> 264 rows of 1024 lanes
    mse_r = jax.random.uniform(k5, shape_ragged, dtype=jnp.float32)
    lpips_r = jax.random.uniform(k6, shape_ragged, dtype=jnp.float32)
    out_r = jax.block_until_ready(weighted_loss(mse_r, lpips_r, alpha))
    ref_r = weighted_loss_ref(mse_r, lpips_r, alpha)
    assert out_r.shape == shape_ragged
    assert jnp.allclose(out_r, ref_r, atol=1e-6, rtol=1e-6), "ragged mismatch"

    print("KERNEL_OK")
</pallas_src>

<mosaic_0001>
module attributes {stable_mosaic.version = 11 : i64} {
  func.func @_weighted_loss_kernel(%arg0: i32, %arg1: memref<1x1xf32, #tpu.memory_space<smem>>, %arg2: memref<16x128xf32, #tpu.memory_space<vmem>>, %arg3: memref<16x128xf32, #tpu.memory_space<vmem>>, %arg4: memref<16x128xf32, #tpu.memory_space<vmem>>) attributes {dimension_semantics = [#tpu.dimension_semantics<parallel>], iteration_bounds = array<i64: 1>, scalar_prefetch = 0 : i64, scratch_operands = 0 : i64, tpu.core_type = #tpu.core_type<tc>, window_params = [{transform_indices = @transform_0, window_bounds = array<i64: 1, 1>}, {transform_indices = @transform_1, window_bounds = array<i64: 16, 128>}, {transform_indices = @transform_2, window_bounds = array<i64: 16, 128>}, {transform_indices = @transform_3, window_bounds = array<i64: 16, 128>}]} {
    %c0 = arith.constant 0 : index
    %c0_0 = arith.constant 0 : index
    %0 = memref.load %arg1[%c0, %c0_0] : memref<1x1xf32, #tpu.memory_space<smem>>
    %cst = arith.constant 1.000000e+00 : f32
    %1 = arith.subf %cst, %0 : f32
    %c0_1 = arith.constant 0 : index
    %c0_2 = arith.constant 0 : index
    %2 = vector.load %arg2[%c0_1, %c0_2] : memref<16x128xf32, #tpu.memory_space<vmem>>, vector<16x128xf32>
    %3 = vector.broadcast %1 : f32 to vector<16x128xf32>
    %4 = arith.mulf %3, %2 : vector<16x128xf32>
    %c0_3 = arith.constant 0 : index
    %c0_4 = arith.constant 0 : index
    %5 = vector.load %arg3[%c0_3, %c0_4] : memref<16x128xf32, #tpu.memory_space<vmem>>, vector<16x128xf32>
    %6 = vector.broadcast %0 : f32 to vector<16x128xf32>
    %7 = arith.mulf %6, %5 : vector<16x128xf32>
    %8 = arith.addf %4, %7 : vector<16x128xf32>
    %c0_5 = arith.constant 0 : index
    %c0_6 = arith.constant 0 : index
    %9 = vector.load %arg4[%c0_5, %c0_6] : memref<16x128xf32, #tpu.memory_space<vmem>>, vector<16x128xf32>
    tpu.vector_store %arg4[%c0_5, %c0_6], %8 {strides = array<i32>} : memref<16x128xf32, #tpu.memory_space<vmem>>, vector<16x128xf32>,
    return
  }
  func.func @transform_0(%arg0: i32) -> (i32, i32) {
    %c0_i32 = arith.constant 0 : i32
    %c0_i32_0 = arith.constant 0 : i32
    %c0_i32_1 = arith.constant 0 : i32
    return %c0_i32, %c0_i32_0 : i32, i32
  }
  func.func @transform_1(%arg0: i32) -> (i32, i32) {
    %c0_i32 = arith.constant 0 : i32
    %c0_i32_0 = arith.constant 0 : i32
    return %arg0, %c0_i32 : i32, i32
  }
  func.func @transform_2(%arg0: i32) -> (i32, i32) {
    %c0_i32 = arith.constant 0 : i32
    %c0_i32_0 = arith.constant 0 : i32
    return %arg0, %c0_i32 : i32, i32
  }
  func.func @transform_3(%arg0: i32) -> (i32, i32) {
    %c0_i32 = arith.constant 0 : i32
    %c0_i32_0 = arith.constant 0 : i32
    return %arg0, %c0_i32 : i32, i32
  }
}

</mosaic_0001>

<llo_original>
// kernel: tpu_custom_call.1
$region0: #{tpu_custom_call.1}
  #allocation0 [shape = 'u32[]', space=smem, size = 0x4, offset = 0x4, fixed_abs, tag = 'smem constant byte address 0x4 - core index']
  #allocation1 [shape = 'u32[144,128]{1,0:T(1,128)}', space=vmem, size = 0x12000, scoped, tag = 'internal scratch']
  #allocation2 [shape = 'f32[1,1]{1,0:T(1,128)S(6)}', space=smem, size = 0x200, scoped, tag = 'scoped memory for tpu_custom_call.1']
  %s0 = inlined_call_operand.<no memory space> [shape: f32[1,1], index: 0, kind: input, shape index: {}]
  %s1 = inlined_call_operand.hbm [shape: f32[16,128], index: 1, kind: input, shape index: {}]
  %s2 = inlined_call_operand.hbm [shape: f32[16,128], index: 2, kind: input, shape index: {}]
  %s3 = inlined_call_operand.hbm [shape: f32[16,128], index: 3, kind: output, shape index: {}]
  %s4 = sld [smem:[#allocation0]]
  $region30: #{tpu_custom_call.1} parent=0
    _
  %s6 = ssub.s32 1, %s4
  %s7 = scalar_select 0, %s6, %s4
  %8 = sst [smem:[#allocation2]] %s0
  $region1: #{tpu_custom_call.1} parent=0
    #allocation3 [shape = 'u8[8192]{0}', space=vmem, size = 0x2000, scoped, tag = 'input window, operand 1, single buffered']
    #allocation4 [shape = 's32[1]{0}', space=sflag, size = 0x4, scoped, tag = 'scoped memory for tpu_custom_call.1']
    #allocation5 [shape = 's32[1]{0}', space=sflag, size = 0x4, scoped, tag = 'scoped memory for tpu_custom_call.1']
    #allocation6 [shape = 'u8[8192]{0}', space=vmem, size = 0x2000, scoped, tag = 'input window, operand 2, single buffered']
    #allocation7 [shape = 's32[1]{0}', space=sflag, size = 0x4, scoped, tag = 'scoped memory for tpu_custom_call.1']
    #allocation8 [shape = 'u8[8192]{0}', space=vmem, size = 0x2000, scoped, tag = 'output window, operand 0, single buffered']
    %9 = vsyncpa [#allocation4], 0
    %10 = vsyncpa [#allocation7], 0
    %11 = vsyncpa [#allocation5], 0
    // Predicated region
    $region2: #{tpu_custom_call.1} parent=1 // pred_check
      _
    $region3: #{tpu_custom_call.1} parent=1 // pred_check_branch
      %13 = sbr.rel (0) target = $region5
    $region4: #{tpu_custom_call.1} parent=1 // pred_region
      _
    $region5: #{tpu_custom_call.1} parent=1 // pred_fallthru
      _
    // Predicated region
    $region6: #{tpu_custom_call.1} parent=1 // pred_check
      _
    $region7: #{tpu_custom_call.1} parent=1 // pred_check_branch
      %15 = sbr.rel (0) target = $region9
    $region8: #{tpu_custom_call.1} parent=1 // pred_region
      %s17 = ssub.s32 256, 256
      %18 = vsyncadd [#allocation4], %s17
      %s19 = sshll.u32 [#allocation3], 4
      %s20 = int_to_ptr.vmem [resolvable:$true] %s19
      %25 = dma.hbm_to_vmem [thread:$0]  %s1, 256, %s20, [#allocation4], 128, 128, 8
    $region9: #{tpu_custom_call.1} parent=1 // pred_fallthru
      _
    // Predicated region
    $region10: #{tpu_custom_call.1} parent=1 // pred_check
      _
    $region11: #{tpu_custom_call.1} parent=1 // pred_check_branch
      %27 = sbr.rel (0) target = $region13
    $region12: #{tpu_custom_call.1} parent=1 // pred_region
      %s29 = ssub.s32 256, 256
      %30 = vsyncadd [#allocation7], %s29
      %s31 = sshll.u32 [#allocation6], 4
      %s32 = int_to_ptr.vmem [resolvable:$true] %s31
      %37 = dma.hbm_to_vmem [thread:$0]  %s2, 256, %s32, [#allocation7], 128, 128, 8
    $region13: #{tpu_custom_call.1} parent=1 // pred_fallthru
      _
    // Predicated region
    $region14: #{tpu_custom_call.1} parent=1 // pred_check
      _
    $region15: #{tpu_custom_call.1} parent=1 // pred_check_branch
      %39 = sbr.rel (0) target = $region17
    $region16: #{tpu_custom_call.1} parent=1 // pred_region
      %40 = dma.done [#allocation4], 256
    $region17: #{tpu_custom_call.1} parent=1 // pred_fallthru
      _
    // Predicated region
    $region18: #{tpu_custom_call.1} parent=1 // pred_check
      _
    $region19: #{tpu_custom_call.1} parent=1 // pred_check_branch
      %42 = sbr.rel (0) target = $region21
    $region20: #{tpu_custom_call.1} parent=1 // pred_region
      %43 = dma.done [#allocation7], 256
    $region21: #{tpu_custom_call.1} parent=1 // pred_fallthru
      _
    %s44 = sld [smem:[#allocation2]]
    %s45 = ssub.f32 1.0, %s44
    %v46 = vld [vmem:[#allocation3] sm:$0xff]
    %v47 = vld [vmem:[#allocation3 + $0x8] sm:$0xff]
    %v48 = vstv %s45
    %v49 = vmul.f32 %v48, %v46
    %v50 = vmul.f32 %v48, %v47
    %v51 = vld [vmem:[#allocation6] sm:$0xff]
    %v52 = vld [vmem:[#allocation6 + $0x8] sm:$0xff]
    %v53 = vstv %s44
    %v54 = vmul.f32 %v53, %v51
    %v55 = vmul.f32 %v53, %v52
    %v56 = vadd.f32 %v49, %v54
    %v57 = vadd.f32 %v50, %v55
    %58 = vst [vmem:[#allocation8] sm:$0xff] %v56
    %59 = vst [vmem:[#allocation8 + $0x8] sm:$0xff] %v57
    // Predicated region
    $region22: #{tpu_custom_call.1} parent=1 // pred_check
      _
    $region23: #{tpu_custom_call.1} parent=1 // pred_check_branch
      %61 = sbr.rel (0) target = $region25
    $region24: #{tpu_custom_call.1} parent=1 // pred_region
      %s63 = ssub.s32 256, 256
      %64 = vsyncadd [#allocation5], %s63
      %s65 = sshll.u32 [#allocation8], 4
      %s66 = int_to_ptr.vmem [resolvable:$true] %s65
      %71 = dma.vmem_to_hbm [thread:$0]  %s66, 256, %s3, [#allocation5], 128, 128, 8
    $region25: #{tpu_custom_call.1} parent=1 // pred_fallthru
      _
    // Predicated region
    $region26: #{tpu_custom_call.1} parent=1 // pred_check
      _
    $region27: #{tpu_custom_call.1} parent=1 // pred_check_branch
      %73 = sbr.rel (0) target = $region29
    $region28: #{tpu_custom_call.1} parent=1 // pred_region
      %74 = dma.done [#allocation5], 256
    $region29: #{tpu_custom_call.1} parent=1 // pred_fallthru
      _
    %75 = vsyncpa [#allocation4], 1
    %76 = vsyncpa [#allocation7], 1
    %77 = vsyncpa [#allocation5], 1

</llo_original>
